<compile_context>
chip_gen: v6e
topology: v6e:2x2x1
jax: 0.10.0
libtpu: 0.0.40
codegen_flags: <defaults>
</compile_context>

<pallas_src>
import functools

import jax
import jax.numpy as jnp
from jax.experimental import pallas as pl
from jax.experimental.pallas import tpu as pltpu

K_IN = 28 * 28   # 784 logical input features (no explicit lane padding)
N_OUT = 10       # logical number of classes (stored directly, no 128 pad)


def _mlp_kernel(x_ref, w1_ref, b1_ref, w2_ref, b2_ref,
                w3_ref, b3_ref, w4_ref, b4_ref, o_ref):
    # x_ref: (TB, 784) f32 batch tile straight from HBM; weights bf16,
    # biases f32.  Cast activations to bf16 for the MXU, accumulate in f32,
    # apply bias + ReLU on the f32 accumulator, re-pack to bf16 between layers.
    x = x_ref[...].astype(jnp.bfloat16)

    h = jnp.dot(x, w1_ref[...], preferred_element_type=jnp.float32) + b1_ref[...]
    h = jnp.maximum(h, 0.0).astype(jnp.bfloat16)

    h = jnp.dot(h, w2_ref[...], preferred_element_type=jnp.float32) + b2_ref[...]
    h = jnp.maximum(h, 0.0).astype(jnp.bfloat16)

    h = jnp.dot(h, w3_ref[...], preferred_element_type=jnp.float32) + b3_ref[...]
    h = jnp.maximum(h, 0.0).astype(jnp.bfloat16)

    out = jnp.dot(h, w4_ref[...], preferred_element_type=jnp.float32) + b4_ref[...]
    o_ref[...] = out.astype(o_ref.dtype)   # (TB, 10) f32 -- tiny masked store


def _round_up(x, m):
    return (x + m - 1) // m * m


def _choose_tb(B, max_tile):
    """Batch tile: multiple of 8 rows, capped at max_tile, and >=2 grid steps
    whenever possible so the 'parallel' axis feeds both v7x TensorCores."""
    tb_full = _round_up(B, 8)
    if tb_full > max_tile:
        return max_tile
    if B > 8:
        return _round_up(-(-B // 2), 8)
    return tb_full


def _prepare_params(params):
    """Weights to bf16 (MXU), biases stay f32. No shape padding needed."""
    w1, b1, w2, b2, w3, b3, w4, b4 = params
    return (w1.astype(jnp.bfloat16), b1.astype(jnp.float32),
            w2.astype(jnp.bfloat16), b2.astype(jnp.float32),
            w3.astype(jnp.bfloat16), b3.astype(jnp.float32),
            w4.astype(jnp.bfloat16), b4.astype(jnp.float32))


@functools.partial(jax.jit, static_argnames=("max_tile",))
def linear_model_forward(x_nchw, params, *, max_tile=1024):
    """x_nchw: (B, 1, 28, 28) -> logits (B, 10) float32."""
    B = x_nchw.shape[0]
    x_flat = x_nchw.reshape(B, -1).astype(jnp.float32)  # == torch.flatten(1)
    assert x_flat.shape[1] == K_IN

    TB = _choose_tb(B, max_tile)
    B_pad = _round_up(B, TB)
    if B_pad != B:
        # Row-only zero pad (no feature pad, no dtype cast); free when TB | B.
        x_flat = jnp.pad(x_flat, ((0, B_pad - B), (0, 0)))

    w1, b1, w2, b2, w3, b3, w4, b4 = _prepare_params(params)

    def const_spec(arr):
        # Full-array block, same block index every grid step -> DMA'd once,
        # stays resident in VMEM across the batch grid.
        return pl.BlockSpec(arr.shape, lambda i: (0, 0))

    flops = 2 * B_pad * (K_IN * 256 + 256 * 128 + 128 * 64 + 64 * N_OUT)
    bytes_accessed = (
        B_pad * K_IN * 4 + B_pad * N_OUT * 4
        + 2 * (K_IN * 256 + 256 * 128 + 128 * 64 + 64 * N_OUT)   # bf16 weights
        + 4 * (256 + 128 + 64 + N_OUT))                          # f32 biases

    out = pl.pallas_call(
        _mlp_kernel,
        out_shape=jax.ShapeDtypeStruct((B_pad, N_OUT), jnp.float32),
        grid=(B_pad // TB,),
        in_specs=[
            pl.BlockSpec((TB, K_IN), lambda i: (i, 0)),   # x batch tile, f32
            const_spec(w1), const_spec(b1),
            const_spec(w2), const_spec(b2),
            const_spec(w3), const_spec(b3),
            const_spec(w4), const_spec(b4),
        ],
        out_specs=pl.BlockSpec((TB, N_OUT), lambda i: (i, 0)),
        compiler_params=pltpu.CompilerParams(
            dimension_semantics=("parallel",),        # shard batch across TCs
            vmem_limit_bytes=32 * 1024 * 1024),
        cost_estimate=pl.CostEstimate(
            flops=flops, transcendentals=0, bytes_accessed=bytes_accessed),
    )(x_flat, w1, b1, w2, b2, w3, b3, w4, b4)

    return out[:B] if B_pad != B else out


def init_params(key):
    """Deterministic init mimicking nn.Linear default (uniform +-1/sqrt(fan_in)).

    Weights stored transposed vs. PyTorch, i.e. (in_features, out_features),
    so the kernel computes x @ W + b directly. Kept in f32 here; the wrapper
    casts weights to bf16 for the MXU.
    """
    sizes = [(K_IN, 256), (256, 128), (128, 64), (64, N_OUT)]
    params = []
    for fan_in, fan_out in sizes:
        key, kw, kb = jax.random.split(key, 3)
        bound = 1.0 / jnp.sqrt(jnp.float32(fan_in))
        w = jax.random.uniform(kw, (fan_in, fan_out), jnp.float32, -bound, bound)
        b = jax.random.uniform(kb, (1, fan_out), jnp.float32, -bound, bound)
        params += [w, b]
    return tuple(params)


def _reference(x, params):
    """Plain-JAX reference at matching precision (bf16 operands, f32 accum)."""
    w1, b1, w2, b2, w3, b3, w4, b4 = params

    def bf(a):
        return a.astype(jnp.bfloat16).astype(jnp.float32)

    h = bf(x.reshape(x.shape[0], -1))
    h = jnp.maximum(h @ bf(w1) + b1, 0.0)
    h = jnp.maximum(bf(h) @ bf(w2) + b2, 0.0)
    h = jnp.maximum(bf(h) @ bf(w3) + b3, 0.0)
    return bf(h) @ bf(w4) + b4


if __name__ == "__main__":
    key = jax.random.PRNGKey(0)
    k_params, k_x1, k_x2 = jax.random.split(key, 3)
    params = init_params(k_params)

    # Case 1: MNIST-like tiny batch (single grid step), NCHW (2, 1, 28, 28).
    x1 = jax.random.normal(k_x1, (2, 1, 28, 28), dtype=jnp.float32)
    y1 = linear_model_forward(x1, params)
    jax.block_until_ready(y1)
    ref1 = _reference(x1, params)
    assert y1.shape == (2, 10)
    assert jnp.allclose(y1, ref1, atol=2e-2, rtol=2e-2), float(
        jnp.max(jnp.abs(y1 - ref1)))

    # Case 2: batch not a multiple of the tile and grid >= 2 (exercises the
    # pipelined / "parallel" batch axis and the ragged row padding path).
    x2 = jax.random.normal(k_x2, (13, 1, 28, 28), dtype=jnp.float32)
    y2 = linear_model_forward(x2, params, max_tile=8)
    jax.block_until_ready(y2)
    ref2 = _reference(x2, params)
    assert y2.shape == (13, 10)
    assert jnp.allclose(y2, ref2, atol=2e-2, rtol=2e-2), float(
        jnp.max(jnp.abs(y2 - ref2)))

    print("KERNEL_OK")
</pallas_src>

<mosaic_0001>
module attributes {stable_mosaic.version = 11 : i64} {
  func.func @_mlp_kernel(%arg0: i32, %arg1: memref<8x784xf32, #tpu.memory_space<vmem>>, %arg2: memref<784x256xbf16, #tpu.memory_space<vmem>>, %arg3: memref<1x256xf32, #tpu.memory_space<vmem>>, %arg4: memref<256x128xbf16, #tpu.memory_space<vmem>>, %arg5: memref<1x128xf32, #tpu.memory_space<vmem>>, %arg6: memref<128x64xbf16, #tpu.memory_space<vmem>>, %arg7: memref<1x64xf32, #tpu.memory_space<vmem>>, %arg8: memref<64x10xbf16, #tpu.memory_space<vmem>>, %arg9: memref<1x10xf32, #tpu.memory_space<vmem>>, %arg10: memref<8x10xf32, #tpu.memory_space<vmem>>) attributes {dimension_semantics = [#tpu.dimension_semantics<parallel>], iteration_bounds = array<i64: 1>, scalar_prefetch = 0 : i64, scratch_operands = 0 : i64, tpu.core_type = #tpu.core_type<tc>, window_params = [{transform_indices = @transform_0, window_bounds = array<i64: 8, 784>}, {pipeline_mode = #tpu.pipeline_mode<synchronous>, transform_indices = @transform_1, window_bounds = array<i64: 784, 256>}, {pipeline_mode = #tpu.pipeline_mode<synchronous>, transform_indices = @transform_2, window_bounds = array<i64: 1, 256>}, {pipeline_mode = #tpu.pipeline_mode<synchronous>, transform_indices = @transform_3, window_bounds = array<i64: 256, 128>}, {pipeline_mode = #tpu.pipeline_mode<synchronous>, transform_indices = @transform_4, window_bounds = array<i64: 1, 128>}, {pipeline_mode = #tpu.pipeline_mode<synchronous>, transform_indices = @transform_5, window_bounds = array<i64: 128, 64>}, {pipeline_mode = #tpu.pipeline_mode<synchronous>, transform_indices = @transform_6, window_bounds = array<i64: 1, 64>}, {pipeline_mode = #tpu.pipeline_mode<synchronous>, transform_indices = @transform_7, window_bounds = array<i64: 64, 10>}, {pipeline_mode = #tpu.pipeline_mode<synchronous>, transform_indices = @transform_8, window_bounds = array<i64: 1, 10>}, {transform_indices = @transform_9, window_bounds = array<i64: 8, 10>}]} {
    %c0 = arith.constant 0 : index
    %c0_0 = arith.constant 0 : index
    %0 = vector.load %arg1[%c0, %c0_0] : memref<8x784xf32, #tpu.memory_space<vmem>>, vector<8x784xf32>
    %1 = arith.truncf %0 : vector<8x784xf32> to vector<8x784xbf16>
    %c0_1 = arith.constant 0 : index
    %c0_2 = arith.constant 0 : index
    %2 = vector.load %arg2[%c0_1, %c0_2] : memref<784x256xbf16, #tpu.memory_space<vmem>>, vector<784x256xbf16>
    %cst = arith.constant dense<0.000000e+00> : vector<8x256xf32>
    %3 = tpu.matmul %1, %2, %cst {dimension_numbers = #tpu.dot_dimension_numbers<[1], [0], [0], [1], [0, 0, 1, 1], [], []>} : vector<8x784xbf16>, vector<784x256xbf16>, vector<8x256xf32> -> vector<8x256xf32>
    %c0_3 = arith.constant 0 : index
    %c0_4 = arith.constant 0 : index
    %4 = vector.load %arg3[%c0_3, %c0_4] : memref<1x256xf32, #tpu.memory_space<vmem>>, vector<1x256xf32>
    %5 = vector.broadcast %4 : vector<1x256xf32> to vector<8x256xf32>
    %6 = arith.addf %3, %5 : vector<8x256xf32>
    %cst_5 = arith.constant 0.000000e+00 : f32
    %7 = vector.broadcast %cst_5 : f32 to vector<8x256xf32>
    %8 = arith.maximumf %6, %7 : vector<8x256xf32>
    %9 = arith.truncf %8 : vector<8x256xf32> to vector<8x256xbf16>
    %c0_6 = arith.constant 0 : index
    %c0_7 = arith.constant 0 : index
    %10 = vector.load %arg4[%c0_6, %c0_7] : memref<256x128xbf16, #tpu.memory_space<vmem>>, vector<256x128xbf16>
    %cst_8 = arith.constant dense<0.000000e+00> : vector<8x128xf32>
    %11 = tpu.matmul %9, %10, %cst_8 {dimension_numbers = #tpu.dot_dimension_numbers<[1], [0], [0], [1], [0, 0, 1, 1], [], []>} : vector<8x256xbf16>, vector<256x128xbf16>, vector<8x128xf32> -> vector<8x128xf32>
    %c0_9 = arith.constant 0 : index
    %c0_10 = arith.constant 0 : index
    %12 = vector.load %arg5[%c0_9, %c0_10] : memref<1x128xf32, #tpu.memory_space<vmem>>, vector<1x128xf32>
    %13 = vector.broadcast %12 : vector<1x128xf32> to vector<8x128xf32>
    %14 = arith.addf %11, %13 : vector<8x128xf32>
    %cst_11 = arith.constant 0.000000e+00 : f32
    %15 = vector.broadcast %cst_11 : f32 to vector<8x128xf32>
    %16 = arith.maximumf %14, %15 : vector<8x128xf32>
    %17 = arith.truncf %16 : vector<8x128xf32> to vector<8x128xbf16>
    %c0_12 = arith.constant 0 : index
    %c0_13 = arith.constant 0 : index
    %18 = vector.load %arg6[%c0_12, %c0_13] : memref<128x64xbf16, #tpu.memory_space<vmem>>, vector<128x64xbf16>
    %cst_14 = arith.constant dense<0.000000e+00> : vector<8x64xf32>
    %19 = tpu.matmul %17, %18, %cst_14 {dimension_numbers = #tpu.dot_dimension_numbers<[1], [0], [0], [1], [0, 0, 1, 1], [], []>} : vector<8x128xbf16>, vector<128x64xbf16>, vector<8x64xf32> -> vector<8x64xf32>
    %c0_15 = arith.constant 0 : index
    %c0_16 = arith.constant 0 : index
    %20 = vector.load %arg7[%c0_15, %c0_16] : memref<1x64xf32, #tpu.memory_space<vmem>>, vector<1x64xf32>
    %21 = vector.broadcast %20 : vector<1x64xf32> to vector<8x64xf32>
    %22 = arith.addf %19, %21 : vector<8x64xf32>
    %cst_17 = arith.constant 0.000000e+00 : f32
    %23 = vector.broadcast %cst_17 : f32 to vector<8x64xf32>
    %24 = arith.maximumf %22, %23 : vector<8x64xf32>
    %25 = arith.truncf %24 : vector<8x64xf32> to vector<8x64xbf16>
    %c0_18 = arith.constant 0 : index
    %c0_19 = arith.constant 0 : index
    %26 = vector.load %arg8[%c0_18, %c0_19] : memref<64x10xbf16, #tpu.memory_space<vmem>>, vector<64x10xbf16>
    %cst_20 = arith.constant dense<0.000000e+00> : vector<8x10xf32>
    %27 = tpu.matmul %25, %26, %cst_20 {dimension_numbers = #tpu.dot_dimension_numbers<[1], [0], [0], [1], [0, 0, 1, 1], [], []>} : vector<8x64xbf16>, vector<64x10xbf16>, vector<8x10xf32> -> vector<8x10xf32>
    %c0_21 = arith.constant 0 : index
    %c0_22 = arith.constant 0 : index
    %28 = vector.load %arg9[%c0_21, %c0_22] : memref<1x10xf32, #tpu.memory_space<vmem>>, vector<1x10xf32>
    %29 = vector.broadcast %28 : vector<1x10xf32> to vector<8x10xf32>
    %30 = arith.addf %27, %29 : vector<8x10xf32>
    %c0_23 = arith.constant 0 : index
    %c0_24 = arith.constant 0 : index
    %31 = vector.load %arg10[%c0_23, %c0_24] : memref<8x10xf32, #tpu.memory_space<vmem>>, vector<8x10xf32>
    tpu.vector_store %arg10[%c0_23, %c0_24], %30 {strides = array<i32>} : memref<8x10xf32, #tpu.memory_space<vmem>>, vector<8x10xf32>,
    return
  }
  func.func @transform_0(%arg0: i32) -> (i32, i32) {
    %c0_i32 = arith.constant 0 : i32
    %c0_i32_0 = arith.constant 0 : i32
    return %arg0, %c0_i32 : i32, i32
  }
  func.func @transform_1(%arg0: i32) -> (i32, i32) {
    %c0_i32 = arith.constant 0 : i32
    %c0_i32_0 = arith.constant 0 : i32
    %c0_i32_1 = arith.constant 0 : i32
    return %c0_i32, %c0_i32_0 : i32, i32
  }
  func.func @transform_2(%arg0: i32) -> (i32, i32) {
    %c0_i32 = arith.constant 0 : i32
    %c0_i32_0 = arith.constant 0 : i32
    %c0_i32_1 = arith.constant 0 : i32
    return %c0_i32, %c0_i32_0 : i32, i32
  }
  func.func @transform_3(%arg0: i32) -> (i32, i32) {
    %c0_i32 = arith.constant 0 : i32
    %c0_i32_0 = arith.constant 0 : i32
    %c0_i32_1 = arith.constant 0 : i32
    return %c0_i32, %c0_i32_0 : i32, i32
  }
  func.func @transform_4(%arg0: i32) -> (i32, i32) {
    %c0_i32 = arith.constant 0 : i32
    %c0_i32_0 = arith.constant 0 : i32
    %c0_i32_1 = arith.constant 0 : i32
    return %c0_i32, %c0_i32_0 : i32, i32
  }
  func.func @transform_5(%arg0: i32) -> (i32, i32) {
    %c0_i32 = arith.constant 0 : i32
    %c0_i32_0 = arith.constant 0 : i32
    %c0_i32_1 = arith.constant 0 : i32
    return %c0_i32, %c0_i32_0 : i32, i32
  }
  func.func @transform_6(%arg0: i32) -> (i32, i32) {
    %c0_i32 = arith.constant 0 : i32
    %c0_i32_0 = arith.constant 0 : i32
    %c0_i32_1 = arith.constant 0 : i32
    return %c0_i32, %c0_i32_0 : i32, i32
  }
  func.func @transform_7(%arg0: i32) -> (i32, i32) {
    %c0_i32 = arith.constant 0 : i32
    %c0_i32_0 = arith.constant 0 : i32
    %c0_i32_1 = arith.constant 0 : i32
    return %c0_i32, %c0_i32_0 : i32, i32
  }
  func.func @transform_8(%arg0: i32) -> (i32, i32) {
    %c0_i32 = arith.constant 0 : i32
    %c0_i32_0 = arith.constant 0 : i32
    %c0_i32_1 = arith.constant 0 : i32
    return %c0_i32, %c0_i32_0 : i32, i32
  }
  func.func @transform_9(%arg0: i32) -> (i32, i32) {
    %c0_i32 = arith.constant 0 : i32
    %c0_i32_0 = arith.constant 0 : i32
    return %arg0, %c0_i32 : i32, i32
  }
}

</mosaic_0001>

<llo_original>
// kernel: linear_model_forward.1
$region0: #{linear_model_forward.1}
  #allocation0 [shape = 'u32[]', space=smem, size = 0x4, offset = 0x4, fixed_abs, tag = 'smem constant byte address 0x4 - core index']
  #allocation1 [shape = 'u32[144,128]{1,0:T(1,128)}', space=vmem, size = 0x12000, scoped, tag = 'internal scratch']
  %s0 = inlined_call_operand.vmem [shape: f32[8,784], index: 0, kind: input, shape index: {}]
  %s1 = inlined_call_operand.vmem [shape: bf16[784,256], index: 1, kind: input, shape index: {}]
  %s2 = inlined_call_operand.vmem [shape: f32[1,256], index: 2, kind: input, shape index: {}]
  %s3 = inlined_call_operand.vmem [shape: bf16[256,128], index: 3, kind: input, shape index: {}]
  %s4 = inlined_call_operand.vmem [shape: f32[1,128], index: 4, kind: input, shape index: {}]
  %s5 = inlined_call_operand.vmem [shape: bf16[128,64], index: 5, kind: input, shape index: {}]
  %s6 = inlined_call_operand.vmem [shape: f32[1,64], index: 6, kind: input, shape index: {}]
  %s7 = inlined_call_operand.vmem [shape: bf16[64,10], index: 7, kind: input, shape index: {}]
  %s8 = inlined_call_operand.vmem [shape: f32[1,10], index: 8, kind: input, shape index: {}]
  %s9 = inlined_call_operand.vmem [shape: f32[8,10], index: 9, kind: output, shape index: {}]
  %s10 = sld [smem:[#allocation0]]
  $region46: #{linear_model_forward.1} parent=0
    _
  %s12 = ssub.s32 1, %s10
  %s13 = scalar_select 0, %s12, %s10
  // Predicated region
  $region2: #{linear_model_forward.1} parent=0 // pred_check
    _
  $region3: #{linear_model_forward.1} parent=0 // pred_check_branch
    %15 = sbr.rel (0) target = $region5
  $region4: #{linear_model_forward.1} parent=0 // pred_region
    _
  $region5: #{linear_model_forward.1} parent=0 // pred_fallthru
    _
  // Predicated region
  $region6: #{linear_model_forward.1} parent=0 // pred_check
    _
  $region7: #{linear_model_forward.1} parent=0 // pred_check_branch
    %17 = sbr.rel (0) target = $region9
  $region8: #{linear_model_forward.1} parent=0 // pred_region
    _
  $region9: #{linear_model_forward.1} parent=0 // pred_fallthru
    _
  // Predicated region
  $region10: #{linear_model_forward.1} parent=0 // pred_check
    _
  $region11: #{linear_model_forward.1} parent=0 // pred_check_branch
    %19 = sbr.rel (0) target = $region13
  $region12: #{linear_model_forward.1} parent=0 // pred_region
    _
  $region13: #{linear_model_forward.1} parent=0 // pred_fallthru
    _
  // Predicated region
  $region14: #{linear_model_forward.1} parent=0 // pred_check
    _
  $region15: #{linear_model_forward.1} parent=0 // pred_check_branch
    %21 = sbr.rel (0) target = $region17
  $region16: #{linear_model_forward.1} parent=0 // pred_region
    _
  $region17: #{linear_model_forward.1} parent=0 // pred_fallthru
    _
  // Predicated region
  $region18: #{linear_model_forward.1} parent=0 // pred_check
    _
  $region19: #{linear_model_forward.1} parent=0 // pred_check_branch
    %23 = sbr.rel (0) target = $region21
  $region20: #{linear_model_forward.1} parent=0 // pred_region
    _
  $region21: #{linear_model_forward.1} parent=0 // pred_fallthru
    _
  // Predicated region
  $region22: #{linear_model_forward.1} parent=0 // pred_check
    _
  $region23: #{linear_model_forward.1} parent=0 // pred_check_branch
    %25 = sbr.rel (0) target = $region25
  $region24: #{linear_model_forward.1} parent=0 // pred_region
    _
  $region25: #{linear_model_forward.1} parent=0 // pred_fallthru
    _
  // Predicated region
  $region26: #{linear_model_forward.1} parent=0 // pred_check
    _
  $region27: #{linear_model_forward.1} parent=0 // pred_check_branch
    %27 = sbr.rel (0) target = $region29
  $region28: #{linear_model_forward.1} parent=0 // pred_region
    _
  $region29: #{linear_model_forward.1} parent=0 // pred_fallthru
    _
  // Predicated region
  $region30: #{linear_model_forward.1} parent=0 // pred_check
    _
  $region31: #{linear_model_forward.1} parent=0 // pred_check_branch
    %29 = sbr.rel (0) target = $region33
  $region32: #{linear_model_forward.1} parent=0 // pred_region
    _
  $region33: #{linear_model_forward.1} parent=0 // pred_fallthru
    _
  // Predicated region
  $region34: #{linear_model_forward.1} parent=0 // pred_check
    _
  $region35: #{linear_model_forward.1} parent=0 // pred_check_branch
    %31 = sbr.rel (0) target = $region37
  $region36: #{linear_model_forward.1} parent=0 // pred_region
    _
  $region37: #{linear_model_forward.1} parent=0 // pred_fallthru
    _
  %v33 = vld [vmem:[%s0] sm:$0xff]
  %v34 = vld [vmem:[%s0 + $0x8] sm:$0xff]
  %v35 = vld [vmem:[%s0 + $0x10] sm:$0xff]
  %v36 = vld [vmem:[%s0 + $0x18] sm:$0xff]
  %v37 = vld [vmem:[%s0 + $0x20] sm:$0xff]
  %v38 = vld [vmem:[%s0 + $0x28] sm:$0xff]
  %v39 = vld [vmem:[%s0 + $0x30] sm:$0xff]
  %v40 = vpack.c.bf16 %v33, %v33
  %v41 = vpack.c.bf16 %v34, %v34
  %v42 = vpack.c.bf16 %v35, %v35
  %v43 = vpack.c.bf16 %v36, %v36
  %v44 = vpack.c.bf16 %v37, %v37
  %v45 = vpack.c.bf16 %v38, %v38
  %v46 = vpack.c.bf16 %v39, %v39
  %v47 = vld [vmem:[%s1] sm:$0xff]
  %v48 = vld [vmem:[%s1 + $0x8] sm:$0xff]
  %v49 = vld [vmem:[%s1 + $0x10] sm:$0xff]
  %v50 = vld [vmem:[%s1 + $0x18] sm:$0xff]
  %v51 = vld [vmem:[%s1 + $0x20] sm:$0xff]
  %v52 = vld [vmem:[%s1 + $0x28] sm:$0xff]
  %v53 = vld [vmem:[%s1 + $0x30] sm:$0xff]
  %v54 = vld [vmem:[%s1 + $0x38] sm:$0xff]
  %v55 = vld [vmem:[%s1 + $0x40] sm:$0xff]
  %v56 = vld [vmem:[%s1 + $0x48] sm:$0xff]
  %v57 = vld [vmem:[%s1 + $0x50] sm:$0xff]
  %v58 = vld [vmem:[%s1 + $0x58] sm:$0xff]
  %v59 = vld [vmem:[%s1 + $0x60] sm:$0xff]
  %v60 = vld [vmem:[%s1 + $0x68] sm:$0xff]
  %v61 = vld [vmem:[%s1 + $0x70] sm:$0xff]
  %v62 = vld [vmem:[%s1 + $0x78] sm:$0xff]
  %v63 = vld [vmem:[%s1 + $0x80] sm:$0xff]
  %v64 = vld [vmem:[%s1 + $0x88] sm:$0xff]
  %v65 = vld [vmem:[%s1 + $0x90] sm:$0xff]
  %v66 = vld [vmem:[%s1 + $0x98] sm:$0xff]
  %v67 = vld [vmem:[%s1 + $0xa0] sm:$0xff]
  %v68 = vld [vmem:[%s1 + $0xa8] sm:$0xff]
  %v69 = vld [vmem:[%s1 + $0xb0] sm:$0xff]
  %v70 = vld [vmem:[%s1 + $0xb8] sm:$0xff]
  %v71 = vld [vmem:[%s1 + $0xc0] sm:$0xff]
  %v72 = vld [vmem:[%s1 + $0xc8] sm:$0xff]
  %v73 = vld [vmem:[%s1 + $0xd0] sm:$0xff]
  %v74 = vld [vmem:[%s1 + $0xd8] sm:$0xff]
  %v75 = vld [vmem:[%s1 + $0xe0] sm:$0xff]
  %v76 = vld [vmem:[%s1 + $0xe8] sm:$0xff]
  %v77 = vld [vmem:[%s1 + $0xf0] sm:$0xff]
  %v78 = vld [vmem:[%s1 + $0xf8] sm:$0xff]
  %v79 = vld [vmem:[%s1 + $0x100] sm:$0xff]
  %v80 = vld [vmem:[%s1 + $0x108] sm:$0xff]
  %v81 = vld [vmem:[%s1 + $0x110] sm:$0xff]
  %v82 = vld [vmem:[%s1 + $0x118] sm:$0xff]
  %v83 = vld [vmem:[%s1 + $0x120] sm:$0xff]
  %v84 = vld [vmem:[%s1 + $0x128] sm:$0xff]
  %v85 = vld [vmem:[%s1 + $0x130] sm:$0xff]
  %v86 = vld [vmem:[%s1 + $0x138] sm:$0xff]
  %v87 = vld [vmem:[%s1 + $0x140] sm:$0xff]
  %v88 = vld [vmem:[%s1 + $0x148] sm:$0xff]
  %v89 = vld [vmem:[%s1 + $0x150] sm:$0xff]
  %v90 = vld [vmem:[%s1 + $0x158] sm:$0xff]
  %v91 = vld [vmem:[%s1 + $0x160] sm:$0xff]
  %v92 = vld [vmem:[%s1 + $0x168] sm:$0xff]
  %v93 = vld [vmem:[%s1 + $0x170] sm:$0xff]
  %v94 = vld [vmem:[%s1 + $0x178] sm:$0xff]
  %v95 = vld [vmem:[%s1 + $0x180] sm:$0xff]
  %v96 = vld [vmem:[%s1 + $0x188] sm:$0xff]
  %v97 = vld [vmem:[%s1 + $0x190] sm:$0xff]
  %v98 = vld [vmem:[%s1 + $0x198] sm:$0xff]
  %v99 = vld [vmem:[%s1 + $0x1a0] sm:$0xff]
  %v100 = vld [vmem:[%s1 + $0x1a8] sm:$0xff]
  %v101 = vld [vmem:[%s1 + $0x1b0] sm:$0xff]
  %v102 = vld [vmem:[%s1 + $0x1b8] sm:$0xff]
  %v103 = vld [vmem:[%s1 + $0x1c0] sm:$0xff]
  %v104 = vld [vmem:[%s1 + $0x1c8] sm:$0xff]
  %v105 = vld [vmem:[%s1 + $0x1d0] sm:$0xff]
  %v106 = vld [vmem:[%s1 + $0x1d8] sm:$0xff]
  %v107 = vld [vmem:[%s1 + $0x1e0] sm:$0xff]
  %v108 = vld [vmem:[%s1 + $0x1e8] sm:$0xff]
  %v109 = vld [vmem:[%s1 + $0x1f0] sm:$0xff]
  %v110 = vld [vmem:[%s1 + $0x1f8] sm:$0xff]
  %v111 = vld [vmem:[%s1 + $0x200] sm:$0xff]
  %v112 = vld [vmem:[%s1 + $0x208] sm:$0xff]
  %v113 = vld [vmem:[%s1 + $0x210] sm:$0xff]
  %v114 = vld [vmem:[%s1 + $0x218] sm:$0xff]
  %v115 = vld [vmem:[%s1 + $0x220] sm:$0xff]
  %v116 = vld [vmem:[%s1 + $0x228] sm:$0xff]
  %v117 = vld [vmem:[%s1 + $0x230] sm:$0xff]
  %v118 = vld [vmem:[%s1 + $0x238] sm:$0xff]
  %v119 = vld [vmem:[%s1 + $0x240] sm:$0xff]
  %v120 = vld [vmem:[%s1 + $0x248] sm:$0xff]
  %v121 = vld [vmem:[%s1 + $0x250] sm:$0xff]
  %v122 = vld [vmem:[%s1 + $0x258] sm:$0xff]
  %v123 = vld [vmem:[%s1 + $0x260] sm:$0xff]
  %v124 = vld [vmem:[%s1 + $0x268] sm:$0xff]
  %v125 = vld [vmem:[%s1 + $0x270] sm:$0xff]
  %v126 = vld [vmem:[%s1 + $0x278] sm:$0xff]
  %v127 = vld [vmem:[%s1 + $0x280] sm:$0xff]
  %v128 = vld [vmem:[%s1 + $0x288] sm:$0xff]
  %v129 = vld [vmem:[%s1 + $0x290] sm:$0xff]
  %v130 = vld [vmem:[%s1 + $0x298] sm:$0xff]
  %v131 = vld [vmem:[%s1 + $0x2a0] sm:$0xff]
  %v132 = vld [vmem:[%s1 + $0x2a8] sm:$0xff]
  %v133 = vld [vmem:[%s1 + $0x2b0] sm:$0xff]
  %v134 = vld [vmem:[%s1 + $0x2b8] sm:$0xff]
  %v135 = vld [vmem:[%s1 + $0x2c0] sm:$0xff]
  %v136 = vld [vmem:[%s1 + $0x2c8] sm:$0xff]
  %v137 = vld [vmem:[%s1 + $0x2d0] sm:$0xff]
  %v138 = vld [vmem:[%s1 + $0x2d8] sm:$0xff]
  %v139 = vld [vmem:[%s1 + $0x2e0] sm:$0xff]
  %v140 = vld [vmem:[%s1 + $0x2e8] sm:$0xff]
  %v141 = vld [vmem:[%s1 + $0x2f0] sm:$0xff]
  %v142 = vld [vmem:[%s1 + $0x2f8] sm:$0xff]
  %v143 = vld [vmem:[%s1 + $0x300] sm:$0xff]
  %v144 = vld [vmem:[%s1 + $0x308] sm:$0xff]
  %v145 = vld [vmem:[%s2] sm:$0x3]
  %v147 = vlaneseq
  %v148 = vshrl.u32 %v147, 7
  %v149 = vsub.s32 0, %v148
  %v150 = vrot.slane %v145, %v149
  %v151 = vlaneseq
  %v152 = vshrl.u32 %v151, 7
  %v153 = vsub.s32 1, %v152
  %v154 = vrot.slane %v145, %v153
  %v255 = vunpack.c.l.b16 %v47
  %v256 = vunpack.c.h.b16 %v47
  %v257 = vunpack.c.l.b16 %v48
  %v258 = vunpack.c.h.b16 %v48
  %v259 = vunpack.c.l.b16 %v49
  %v260 = vunpack.c.h.b16 %v49
  %v261 = vunpack.c.l.b16 %v50
  %v262 = vunpack.c.h.b16 %v50
  %v263 = vunpack.c.l.b16 %v51
  %v264 = vunpack.c.h.b16 %v51
  %v265 = vunpack.c.l.b16 %v52
  %v266 = vunpack.c.h.b16 %v52
  %v267 = vunpack.c.l.b16 %v53
  %v268 = vunpack.c.h.b16 %v53
  %v269 = vunpack.c.l.b16 %v54
  %v270 = vunpack.c.h.b16 %v54
  %v271 = vunpack.c.l.b16 %v55
  %v272 = vunpack.c.h.b16 %v55
  %v273 = vunpack.c.l.b16 %v56
  %v274 = vunpack.c.h.b16 %v56
  %v275 = vunpack.c.l.b16 %v57
  %v276 = vunpack.c.h.b16 %v57
  %v277 = vunpack.c.l.b16 %v58
  %v278 = vunpack.c.h.b16 %v58
  %v279 = vunpack.c.l.b16 %v59
  %v280 = vunpack.c.h.b16 %v59
  %v281 = vunpack.c.l.b16 %v60
  %v282 = vunpack.c.h.b16 %v60
  %v283 = vunpack.c.l.b16 %v61
  %v284 = vunpack.c.h.b16 %v61
  %v285 = vunpack.c.l.b16 %v62
  %v286 = vunpack.c.h.b16 %v62
  %v287 = vunpack.c.l.b16 %v63
  %v288 = vunpack.c.h.b16 %v63
  %v289 = vunpack.c.l.b16 %v64
  %v290 = vunpack.c.h.b16 %v64
  %v291 = vunpack.c.l.b16 %v65
  %v292 = vunpack.c.h.b16 %v65
  %v293 = vunpack.c.l.b16 %v66
  %v294 = vunpack.c.h.b16 %v66
  %v295 = vunpack.c.l.b16 %v67
  %v296 = vunpack.c.h.b16 %v67
  %v297 = vunpack.c.l.b16 %v68
  %v298 = vunpack.c.h.b16 %v68
  %v299 = vunpack.c.l.b16 %v69
  %v300 = vunpack.c.h.b16 %v69
  %v301 = vunpack.c.l.b16 %v70
  %v302 = vunpack.c.h.b16 %v70
  %v303 = vunpack.c.l.b16 %v71
  %v304 = vunpack.c.h.b16 %v71
  %v305 = vunpack.c.l.b16 %v72
  %v306 = vunpack.c.h.b16 %v72
  %v307 = vunpack.c.l.b16 %v73
  %v308 = vunpack.c.h.b16 %v73
  %v309 = vunpack.c.l.b16 %v74
  %v310 = vunpack.c.h.b16 %v74
  %v311 = vunpack.c.l.b16 %v75
  %v312 = vunpack.c.h.b16 %v75
  %v313 = vunpack.c.l.b16 %v76
  %v314 = vunpack.c.h.b16 %v76
  %v315 = vunpack.c.l.b16 %v77
  %v316 = vunpack.c.h.b16 %v77
  %v317 = vunpack.c.l.b16 %v78
  %v318 = vunpack.c.h.b16 %v78
  %v319 = vunpack.c.l.b16 %v79
  %v320 = vunpack.c.h.b16 %v79
  %v321 = vunpack.c.l.b16 %v80
  %v322 = vunpack.c.h.b16 %v80
  %v323 = vunpack.c.l.b16 %v81
  %v324 = vunpack.c.h.b16 %v81
  %v325 = vunpack.c.l.b16 %v82
  %v326 = vunpack.c.h.b16 %v82
  %v327 = vunpack.c.l.b16 %v83
  %v328 = vunpack.c.h.b16 %v83
  %v329 = vunpack.c.l.b16 %v84
  %v330 = vunpack.c.h.b16 %v84
  %v331 = vunpack.c.l.b16 %v85
  %v332 = vunpack.c.h.b16 %v85
  %v333 = vunpack.c.l.b16 %v86
  %v334 = vunpack.c.h.b16 %v86
  %v335 = vunpack.c.l.b16 %v87
  %v336 = vunpack.c.h.b16 %v87
  %v337 = vunpack.c.l.b16 %v88
  %v338 = vunpack.c.h.b16 %v88
  %v339 = vunpack.c.l.b16 %v89
  %v340 = vunpack.c.h.b16 %v89
  %v341 = vunpack.c.l.b16 %v90
  %v342 = vunpack.c.h.b16 %v90
  %v343 = vunpack.c.l.b16 %v91
  %v344 = vunpack.c.h.b16 %v91
  %v345 = vunpack.c.l.b16 %v92
  %v346 = vunpack.c.h.b16 %v92
  %v347 = vunpack.c.l.b16 %v93
  %v348 = vunpack.c.h.b16 %v93
  %v349 = vunpack.c.l.b16 %v94
  %v350 = vunpack.c.h.b16 %v94
  %v351 = vunpack.c.l.b16 %v95
  %v352 = vunpack.c.h.b16 %v95
  %v353 = vunpack.c.l.b16 %v96
  %v354 = vunpack.c.h.b16 %v96
  %v355 = vunpack.c.l.b16 %v97
  %v356 = vunpack.c.h.b16 %v97
  %v357 = vunpack.c.l.b16 %v98
  %v358 = vunpack.c.h.b16 %v98
  %v359 = vunpack.c.l.b16 %v99
  %v360 = vunpack.c.h.b16 %v99
  %v361 = vunpack.c.l.b16 %v100
  %v362 = vunpack.c.h.b16 %v100
  %v363 = vunpack.c.l.b16 %v101
  %v364 = vunpack.c.h.b16 %v101
  %v365 = vunpack.c.l.b16 %v102
  %v366 = vunpack.c.h.b16 %v102
  %v367 = vunpack.c.l.b16 %v103
  %v368 = vunpack.c.h.b16 %v103
  %v369 = vunpack.c.l.b16 %v104
  %v370 = vunpack.c.h.b16 %v104
  %v371 = vunpack.c.l.b16 %v105
  %v372 = vunpack.c.h.b16 %v105
  %v373 = vunpack.c.l.b16 %v106
  %v374 = vunpack.c.h.b16 %v106
  %v375 = vunpack.c.l.b16 %v107
  %v376 = vunpack.c.h.b16 %v107
  %v377 = vunpack.c.l.b16 %v108
  %v378 = vunpack.c.h.b16 %v108
  %v379 = vunpack.c.l.b16 %v109
  %v380 = vunpack.c.h.b16 %v109
  %v381 = vunpack.c.l.b16 %v110
  %v382 = vunpack.c.h.b16 %v110
  %v383 = vunpack.c.l.b16 %v111
  %v384 = vunpack.c.h.b16 %v111
  %v385 = vunpack.c.l.b16 %v112
  %v386 = vunpack.c.h.b16 %v112
  %v387 = vunpack.c.l.b16 %v113
  %v388 = vunpack.c.h.b16 %v113
  %v389 = vunpack.c.l.b16 %v114
  %v390 = vunpack.c.h.b16 %v114
  %v391 = vunpack.c.l.b16 %v115
  %v392 = vunpack.c.h.b16 %v115
  %v393 = vunpack.c.l.b16 %v116
  %v394 = vunpack.c.h.b16 %v116
  %v395 = vunpack.c.l.b16 %v117
  %v396 = vunpack.c.h.b16 %v117
  %v397 = vunpack.c.l.b16 %v118
  %v398 = vunpack.c.h.b16 %v118
  %v399 = vunpack.c.l.b16 %v119
  %v400 = vunpack.c.h.b16 %v119
  %v401 = vunpack.c.l.b16 %v120
  %v402 = vunpack.c.h.b16 %v120
  %v403 = vunpack.c.l.b16 %v121
  %v404 = vunpack.c.h.b16 %v121
  %v405 = vunpack.c.l.b16 %v122
  %v406 = vunpack.c.h.b16 %v122
  %v407 = vunpack.c.l.b16 %v123
  %v408 = vunpack.c.h.b16 %v123
  %v409 = vunpack.c.l.b16 %v124
  %v410 = vunpack.c.h.b16 %v124
  %v411 = vunpack.c.l.b16 %v125
  %v412 = vunpack.c.h.b16 %v125
  %v413 = vunpack.c.l.b16 %v126
  %v414 = vunpack.c.h.b16 %v126
  %v415 = vunpack.c.l.b16 %v127
  %v416 = vunpack.c.h.b16 %v127
  %v417 = vunpack.c.l.b16 %v128
  %v418 = vunpack.c.h.b16 %v128
  %v419 = vunpack.c.l.b16 %v129
  %v420 = vunpack.c.h.b16 %v129
  %v421 = vunpack.c.l.b16 %v130
  %v422 = vunpack.c.h.b16 %v130
  %v423 = vunpack.c.l.b16 %v131
  %v424 = vunpack.c.h.b16 %v131
  %v425 = vunpack.c.l.b16 %v132
  %v426 = vunpack.c.h.b16 %v132
  %v427 = vunpack.c.l.b16 %v133
  %v428 = vunpack.c.h.b16 %v133
  %v429 = vunpack.c.l.b16 %v134
  %v430 = vunpack.c.h.b16 %v134
  %v431 = vunpack.c.l.b16 %v135
  %v432 = vunpack.c.h.b16 %v135
  %v433 = vunpack.c.l.b16 %v136
  %v434 = vunpack.c.h.b16 %v136
  %v435 = vunpack.c.l.b16 %v137
  %v436 = vunpack.c.h.b16 %v137
  %v437 = vunpack.c.l.b16 %v138
  %v438 = vunpack.c.h.b16 %v138
  %v439 = vunpack.c.l.b16 %v139
  %v440 = vunpack.c.h.b16 %v139
  %v441 = vunpack.c.l.b16 %v140
  %v442 = vunpack.c.h.b16 %v140
  %v443 = vunpack.c.l.b16 %v141
  %v444 = vunpack.c.h.b16 %v141
  %v445 = vunpack.c.l.b16 %v142
  %v446 = vunpack.c.h.b16 %v142
  %v447 = vunpack.c.l.b16 %v143
  %v448 = vunpack.c.h.b16 %v143
  %v449 = vunpack.c.l.b16 %v144
  %v450 = vunpack.c.h.b16 %v144
  %v451 = vpack.c.b16 %v257, %v255
  %v452 = vpack.c.b16 %v258, %v256
  %v453 = vpack.c.b16 %v261, %v259
  %v454 = vpack.c.b16 %v262, %v260
  %v455 = vpack.c.b16 %v265, %v263
  %v456 = vpack.c.b16 %v266, %v264
  %v457 = vpack.c.b16 %v269, %v267
  %v458 = vpack.c.b16 %v270, %v268
  %v459 = vpack.c.b16 %v273, %v271
  %v460 = vpack.c.b16 %v274, %v272
  %v461 = vpack.c.b16 %v277, %v275
  %v462 = vpack.c.b16 %v278, %v276
  %v463 = vpack.c.b16 %v281, %v279
  %v464 = vpack.c.b16 %v282, %v280
  %v465 = vpack.c.b16 %v285, %v283
  %v466 = vpack.c.b16 %v286, %v284
  %v467 = vpack.c.b16 %v289, %v287
  %v468 = vpack.c.b16 %v290, %v288
  %v469 = vpack.c.b16 %v293, %v291
  %v470 = vpack.c.b16 %v294, %v292
  %v471 = vpack.c.b16 %v297, %v295
  %v472 = vpack.c.b16 %v298, %v296
  %v473 = vpack.c.b16 %v301, %v299
  %v474 = vpack.c.b16 %v302, %v300
  %v475 = vpack.c.b16 %v305, %v303
  %v476 = vpack.c.b16 %v306, %v304
  %v477 = vpack.c.b16 %v309, %v307
  %v478 = vpack.c.b16 %v310, %v308
  %v479 = vpack.c.b16 %v313, %v311
  %v480 = vpack.c.b16 %v314, %v312
  %v481 = vpack.c.b16 %v317, %v315
  %v482 = vpack.c.b16 %v318, %v316
  %v483 = vpack.c.b16 %v321, %v319
  %v484 = vpack.c.b16 %v322, %v320
  %v485 = vpack.c.b16 %v325, %v323
  %v486 = vpack.c.b16 %v326, %v324
  %v487 = vpack.c.b16 %v329, %v327
  %v488 = vpack.c.b16 %v330, %v328
  %v489 = vpack.c.b16 %v333, %v331
  %v490 = vpack.c.b16 %v334, %v332
  %v491 = vpack.c.b16 %v337, %v335
  %v492 = vpack.c.b16 %v338, %v336
  %v493 = vpack.c.b16 %v341, %v339
  %v494 = vpack.c.b16 %v342, %v340
  %v495 = vpack.c.b16 %v345, %v343
  %v496 = vpack.c.b16 %v346, %v344
  %v497 = vpack.c.b16 %v349, %v347
  %v498 = vpack.c.b16 %v350, %v348
  %v499 = vpack.c.b16 %v353, %v351
  %v500 = vpack.c.b16 %v354, %v352
  %v501 = vpack.c.b16 %v357, %v355
  %v502 = vpack.c.b16 %v358, %v356
  %v503 = vpack.c.b16 %v361, %v359
  %v504 = vpack.c.b16 %v362, %v360
  %v505 = vpack.c.b16 %v365, %v363
  %v506 = vpack.c.b16 %v366, %v364
  %v507 = vpack.c.b16 %v369, %v367
  %v508 = vpack.c.b16 %v370, %v368
  %v509 = vpack.c.b16 %v373, %v371
  %v510 = vpack.c.b16 %v374, %v372
  %v511 = vpack.c.b16 %v377, %v375
  %v512 = vpack.c.b16 %v378, %v376
  %v513 = vpack.c.b16 %v381, %v379
  %v514 = vpack.c.b16 %v382, %v380
  %v515 = vpack.c.b16 %v385, %v383
  %v516 = vpack.c.b16 %v386, %v384
  %v517 = vpack.c.b16 %v389, %v387
  %v518 = vpack.c.b16 %v390, %v388
  %v519 = vpack.c.b16 %v393, %v391
  %v520 = vpack.c.b16 %v394, %v392
  %v521 = vpack.c.b16 %v397, %v395
  %v522 = vpack.c.b16 %v398, %v396
  %v523 = vpack.c.b16 %v401, %v399
  %v524 = vpack.c.b16 %v402, %v400
  %v525 = vpack.c.b16 %v405, %v403
  %v526 = vpack.c.b16 %v406, %v404
  %v527 = vpack.c.b16 %v409, %v407
  %v528 = vpack.c.b16 %v410, %v408
  %v529 = vpack.c.b16 %v413, %v411
  %v530 = vpack.c.b16 %v414, %v412
  %v531 = vpack.c.b16 %v417, %v415
  %v532 = vpack.c.b16 %v418, %v416
  %v533 = vpack.c.b16 %v421, %v419
  %v534 = vpack.c.b16 %v422, %v420
  %v535 = vpack.c.b16 %v425, %v423
  %v536 = vpack.c.b16 %v426, %v424
  %v537 = vpack.c.b16 %v429, %v427
  %v538 = vpack.c.b16 %v430, %v428
  %v539 = vpack.c.b16 %v433, %v431
  %v540 = vpack.c.b16 %v434, %v432
  %v541 = vpack.c.b16 %v437, %v435
  %v542 = vpack.c.b16 %v438, %v436
  %v543 = vpack.c.b16 %v441, %v439
  %v544 = vpack.c.b16 %v442, %v440
  %v545 = vpack.c.b16 %v445, %v443
  %v546 = vpack.c.b16 %v446, %v444
  %v547 = vpack.c.b16 %v449, %v447
  %v548 = vpack.c.b16 %v450, %v448
  %vm647 = vcmask 130048
  %v649 = vsel %vm647, %v46, 0
  %651 = vmatprep.subr.bf16.mxu0 %v466
  %652 = vmatpush1.bf16.msra.mxu0 %v465
  %653 = vmatprep.subr.bf16.mxu0 %v464
  %654 = vmatpush1.bf16.msra.mxu0 %v463
  %655 = vmatprep.subr.bf16.mxu0 %v462
  %656 = vmatpush1.bf16.msra.mxu0 %v461
  %657 = vmatprep.subr.bf16.mxu0 %v460
  %658 = vmatpush1.bf16.msra.mxu0 %v459
  %659 = vmatprep.subr.bf16.mxu0 %v458
  %660 = vmatpush1.bf16.msra.mxu0 %v457
  %661 = vmatprep.subr.bf16.mxu0 %v456
  %662 = vmatpush1.bf16.msra.mxu0 %v455
  %663 = vmatprep.subr.bf16.mxu0 %v454
  %664 = vmatpush1.bf16.msra.mxu0 %v453
  %665 = vmatprep.subr.bf16.mxu0 %v452
  %666 = vmatpush1.bf16.msra.mxu0 %v451
  %667 = vmatprep.subr.bf16.mxu0 %v482
  %668 = vmatpush2.bf16.msra.mxu0 %v481
  %669 = vmatprep.subr.bf16.mxu0 %v480
  %670 = vmatpush2.bf16.msra.mxu0 %v479
  %671 = vmatprep.subr.bf16.mxu0 %v478
  %672 = vmatpush2.bf16.msra.mxu0 %v477
  %673 = vmatprep.subr.bf16.mxu0 %v476
  %674 = vmatpush2.bf16.msra.mxu0 %v475
  %675 = vmatprep.subr.bf16.mxu0 %v474
  %676 = vmatpush2.bf16.msra.mxu0 %v473
  %677 = vmatprep.subr.bf16.mxu0 %v472
  %678 = vmatpush2.bf16.msra.mxu0 %v471
  %679 = vmatprep.subr.bf16.mxu0 %v470
  %680 = vmatpush2.bf16.msra.mxu0 %v469
  %681 = vmatprep.subr.bf16.mxu0 %v468
  %682 = vmatpush2.bf16.msra.mxu0 %v467
  %683 = vmatprep.mubr.bf16.mxu0 %v41
  %684 = vmatmul.mubr.bf16.gmra.mxu0 %v40
  %v685 = vpop.f32.mrf.mxu0
  %v686 = vadd.f32 %v150, %v685
  %v687 = vpop.f32.mrf.mxu0
  %v688 = vadd.f32 %v154, %v687
  %v689 = vpop.f32.mrf.mxu0
  %v690 = vpop.f32.mrf.mxu0
  %691 = vdwg.mxu0
  %692 = vmatprep.subr.bf16.mxu0 %v498
  %693 = vmatpush1.bf16.msra.mxu0 %v497
  %694 = vmatprep.subr.bf16.mxu0 %v496
  %695 = vmatpush1.bf16.msra.mxu0 %v495
  %696 = vmatprep.subr.bf16.mxu0 %v494
  %697 = vmatpush1.bf16.msra.mxu0 %v493
  %698 = vmatprep.subr.bf16.mxu0 %v492
  %699 = vmatpush1.bf16.msra.mxu0 %v491
  %700 = vmatprep.subr.bf16.mxu0 %v490
  %701 = vmatpush1.bf16.msra.mxu0 %v489
  %702 = vmatprep.subr.bf16.mxu0 %v488
  %703 = vmatpush1.bf16.msra.mxu0 %v487
  %704 = vmatprep.subr.bf16.mxu0 %v486
  %705 = vmatpush1.bf16.msra.mxu0 %v485
  %706 = vmatprep.subr.bf16.mxu0 %v484
  %707 = vmatpush1.bf16.msra.mxu0 %v483
  %708 = vmatprep.subr.bf16.mxu0 %v514
  %709 = vmatpush2.bf16.msra.mxu0 %v513
  %710 = vmatprep.subr.bf16.mxu0 %v512
  %711 = vmatpush2.bf16.msra.mxu0 %v511
  %712 = vmatprep.subr.bf16.mxu0 %v510
  %713 = vmatpush2.bf16.msra.mxu0 %v509
  %714 = vmatprep.subr.bf16.mxu0 %v508
  %715 = vmatpush2.bf16.msra.mxu0 %v507
  %716 = vmatprep.subr.bf16.mxu0 %v506
  %717 = vmatpush2.bf16.msra.mxu0 %v505
  %718 = vmatprep.subr.bf16.mxu0 %v504
  %719 = vmatpush2.bf16.msra.mxu0 %v503
  %720 = vmatprep.subr.bf16.mxu0 %v502
  %721 = vmatpush2.bf16.msra.mxu0 %v501
  %722 = vmatprep.subr.bf16.mxu0 %v500
  %723 = vmatpush2.bf16.msra.mxu0 %v499
  %724 = vmatprep.mubr.bf16.mxu0 %v43
  %725 = vmatmul.mubr.bf16.gmra.mxu0 %v42
  %v726 = vpop.f32.mrf.mxu0
  %v727 = vadd.f32 %v686, %v726
  %v728 = vpop.f32.mrf.mxu0
  %v729 = vadd.f32 %v688, %v728
  %v730 = vpop.f32.mrf.mxu0
  %v731 = vpop.f32.mrf.mxu0
  %732 = vdwg.mxu0
  %733 = vmatprep.subr.bf16.mxu0 %v530
  %734 = vmatpush1.bf16.msra.mxu0 %v529
  %735 = vmatprep.subr.bf16.mxu0 %v528
  %736 = vmatpush1.bf16.msra.mxu0 %v527
  %737 = vmatprep.subr.bf16.mxu0 %v526
  %738 = vmatpush1.bf16.msra.mxu0 %v525
  %739 = vmatprep.subr.bf16.mxu0 %v524
  %740 = vmatpush1.bf16.msra.mxu0 %v523
  %741 = vmatprep.subr.bf16.mxu0 %v522
  %742 = vmatpush1.bf16.msra.mxu0 %v521
  %743 = vmatprep.subr.bf16.mxu0 %v520
  %744 = vmatpush1.bf16.msra.mxu0 %v519
  %745 = vmatprep.subr.bf16.mxu0 %v518
  %746 = vmatpush1.bf16.msra.mxu0 %v517
  %747 = vmatprep.subr.bf16.mxu0 %v516
  %748 = vmatpush1.bf16.msra.mxu0 %v515
  %749 = vmatprep.subr.bf16.mxu0 %v546
  %750 = vmatpush2.bf16.msra.mxu0 %v545
  %751 = vmatprep.subr.bf16.mxu0 %v544
  %752 = vmatpush2.bf16.msra.mxu0 %v543
  %753 = vmatprep.subr.bf16.mxu0 %v542
  %754 = vmatpush2.bf16.msra.mxu0 %v541
  %755 = vmatprep.subr.bf16.mxu0 %v540
  %756 = vmatpush2.bf16.msra.mxu0 %v539
  %757 = vmatprep.subr.bf16.mxu0 %v538
  %758 = vmatpush2.bf16.msra.mxu0 %v537
  %759 = vmatprep.subr.bf16.mxu0 %v536
  %760 = vmatpush2.bf16.msra.mxu0 %v535
  %761 = vmatprep.subr.bf16.mxu0 %v534
  %762 = vmatpush2.bf16.msra.mxu0 %v533
  %763 = vmatprep.subr.bf16.mxu0 %v532
  %764 = vmatpush2.bf16.msra.mxu0 %v531
  %765 = vmatprep.mubr.bf16.mxu0 %v45
  %766 = vmatmul.mubr.bf16.gmra.mxu0 %v44
  %v767 = vpop.f32.mrf.mxu0
  %v768 = vadd.f32 %v727, %v767
  %v769 = vpop.f32.mrf.mxu0
  %v770 = vadd.f32 %v729, %v769
  %v771 = vpop.f32.mrf.mxu0
  %v772 = vpop.f32.mrf.mxu0
  %773 = vdwg.mxu0
  %774 = vmatprep.subr.bf16.mxu0 0
  %775 = vmatpush1.bf16.msra.mxu0 0
  %776 = vmatprep.subr.bf16.mxu0 0
  %777 = vmatpush1.bf16.msra.mxu0 0
  %778 = vmatprep.subr.bf16.mxu0 0
  %779 = vmatpush1.bf16.msra.mxu0 0
  %780 = vmatprep.subr.bf16.mxu0 0
  %781 = vmatpush1.bf16.msra.mxu0 0
  %782 = vmatprep.subr.bf16.mxu0 0
  %783 = vmatpush1.bf16.msra.mxu0 0
  %784 = vmatprep.subr.bf16.mxu0 0
  %785 = vmatpush1.bf16.msra.mxu0 0
  %786 = vmatprep.subr.bf16.mxu0 0
  %787 = vmatpush1.bf16.msra.mxu0 0
  %788 = vmatprep.subr.bf16.mxu0 %v548
  %789 = vmatpush1.bf16.msra.mxu0 %v547
  %790 = vmatprep.subr.bf16.mxu0 0
  %791 = vmatpush2.bf16.msra.mxu0 0
  %792 = vmatprep.subr.bf16.mxu0 0
  %793 = vmatpush2.bf16.msra.mxu0 0
  %794 = vmatprep.subr.bf16.mxu0 0
  %795 = vmatpush2.bf16.msra.mxu0 0
  %796 = vmatprep.subr.bf16.mxu0 0
  %797 = vmatpush2.bf16.msra.mxu0 0
  %798 = vmatprep.subr.bf16.mxu0 0
  %799 = vmatpush2.bf16.msra.mxu0 0
  %800 = vmatprep.subr.bf16.mxu0 0
  %801 = vmatpush2.bf16.msra.mxu0 0
  %802 = vmatprep.subr.bf16.mxu0 0
  %803 = vmatpush2.bf16.msra.mxu0 0
  %804 = vmatprep.subr.bf16.mxu0 0
  %805 = vmatpush2.bf16.msra.mxu0 0
  %806 = vmatprep.mubr.bf16.mxu0 0
  %807 = vmatmul.mubr.bf16.gmra.mxu0 %v649
  %v808 = vpop.f32.mrf.mxu0
  %v809 = vadd.f32 %v768, %v808
  %v810 = vpop.f32.mrf.mxu0
  %v811 = vadd.f32 %v770, %v810
  %v812 = vpop.f32.mrf.mxu0
  %v813 = vpop.f32.mrf.mxu0
  %814 = vdwg.mxu0
  %v815 = vmax.f32 %v809, 0.0
  %v816 = vmax.f32 %v811, 0.0
  %v817 = vpack.c.bf16 %v815, %v815
  %v818 = vpack.c.bf16 %v816, %v816
  %v819 = vld [vmem:[%s3] sm:$0xf]
  %v820 = vld [vmem:[%s3 + $0x4] sm:$0xf]
  %v821 = vld [vmem:[%s3 + $0x8] sm:$0xf]
  %v822 = vld [vmem:[%s3 + $0xc] sm:$0xf]
  %v823 = vld [vmem:[%s3 + $0x10] sm:$0xf]
  %v824 = vld [vmem:[%s3 + $0x14] sm:$0xf]
  %v825 = vld [vmem:[%s3 + $0x18] sm:$0xf]
  %v826 = vld [vmem:[%s3 + $0x1c] sm:$0xf]
  %v827 = vld [vmem:[%s3 + $0x20] sm:$0xf]
  %v828 = vld [vmem:[%s3 + $0x24] sm:$0xf]
  %v829 = vld [vmem:[%s3 + $0x28] sm:$0xf]
  %v830 = vld [vmem:[%s3 + $0x2c] sm:$0xf]
  %v831 = vld [vmem:[%s3 + $0x30] sm:$0xf]
  %v832 = vld [vmem:[%s3 + $0x34] sm:$0xf]
  %v833 = vld [vmem:[%s3 + $0x38] sm:$0xf]
  %v834 = vld [vmem:[%s3 + $0x3c] sm:$0xf]
  %v835 = vld [vmem:[%s3 + $0x40] sm:$0xf]
  %v836 = vld [vmem:[%s3 + $0x44] sm:$0xf]
  %v837 = vld [vmem:[%s3 + $0x48] sm:$0xf]
  %v838 = vld [vmem:[%s3 + $0x4c] sm:$0xf]
  %v839 = vld [vmem:[%s3 + $0x50] sm:$0xf]
  %v840 = vld [vmem:[%s3 + $0x54] sm:$0xf]
  %v841 = vld [vmem:[%s3 + $0x58] sm:$0xf]
  %v842 = vld [vmem:[%s3 + $0x5c] sm:$0xf]
  %v843 = vld [vmem:[%s3 + $0x60] sm:$0xf]
  %v844 = vld [vmem:[%s3 + $0x64] sm:$0xf]
  %v845 = vld [vmem:[%s3 + $0x68] sm:$0xf]
  %v846 = vld [vmem:[%s3 + $0x6c] sm:$0xf]
  %v847 = vld [vmem:[%s3 + $0x70] sm:$0xf]
  %v848 = vld [vmem:[%s3 + $0x74] sm:$0xf]
  %v849 = vld [vmem:[%s3 + $0x78] sm:$0xf]
  %v850 = vld [vmem:[%s3 + $0x7c] sm:$0xf]
  %v851 = vld [vmem:[%s4] sm:$0x1]
  %v853 = vlaneseq
  %v854 = vshrl.u32 %v853, 7
  %v855 = vsub.s32 0, %v854
  %v856 = vrot.slane %v851, %v855
  %v890 = vunpack.c.l.b16 %v819
  %v891 = vunpack.c.l.b16 %v820
  %v892 = vunpack.c.l.b16 %v821
  %v893 = vunpack.c.l.b16 %v822
  %v894 = vunpack.c.l.b16 %v823
  %v895 = vunpack.c.l.b16 %v824
  %v896 = vunpack.c.l.b16 %v825
  %v897 = vunpack.c.l.b16 %v826
  %v898 = vunpack.c.l.b16 %v827
  %v899 = vunpack.c.l.b16 %v828
  %v900 = vunpack.c.l.b16 %v829
  %v901 = vunpack.c.l.b16 %v830
  %v902 = vunpack.c.l.b16 %v831
  %v903 = vunpack.c.l.b16 %v832
  %v904 = vunpack.c.l.b16 %v833
  %v905 = vunpack.c.l.b16 %v834
  %v906 = vunpack.c.l.b16 %v835
  %v907 = vunpack.c.l.b16 %v836
  %v908 = vunpack.c.l.b16 %v837
  %v909 = vunpack.c.l.b16 %v838
  %v910 = vunpack.c.l.b16 %v839
  %v911 = vunpack.c.l.b16 %v840
  %v912 = vunpack.c.l.b16 %v841
  %v913 = vunpack.c.l.b16 %v842
  %v914 = vunpack.c.l.b16 %v843
  %v915 = vunpack.c.l.b16 %v844
  %v916 = vunpack.c.l.b16 %v845
  %v917 = vunpack.c.l.b16 %v846
  %v918 = vunpack.c.l.b16 %v847
  %v919 = vunpack.c.l.b16 %v848
  %v920 = vunpack.c.l.b16 %v849
  %v921 = vunpack.c.l.b16 %v850
  %v922 = vpack.c.b16 %v891, %v890
  %v923 = vpack.c.b16 %v893, %v892
  %v924 = vpack.c.b16 %v895, %v894
  %v925 = vpack.c.b16 %v897, %v896
  %v926 = vpack.c.b16 %v899, %v898
  %v927 = vpack.c.b16 %v901, %v900
  %v928 = vpack.c.b16 %v903, %v902
  %v929 = vpack.c.b16 %v905, %v904
  %v930 = vpack.c.b16 %v907, %v906
  %v931 = vpack.c.b16 %v909, %v908
  %v932 = vpack.c.b16 %v911, %v910
  %v933 = vpack.c.b16 %v913, %v912
  %v934 = vpack.c.b16 %v915, %v914
  %v935 = vpack.c.b16 %v917, %v916
  %v936 = vpack.c.b16 %v919, %v918
  %v937 = vpack.c.b16 %v921, %v920
  %954 = vmatprep.subr.bf16.mxu0 0
  %955 = vmatpush1.bf16.msra.mxu0 %v929
  %956 = vmatprep.subr.bf16.mxu0 0
  %957 = vmatpush1.bf16.msra.mxu0 %v928
  %958 = vmatprep.subr.bf16.mxu0 0
  %959 = vmatpush1.bf16.msra.mxu0 %v927
  %960 = vmatprep.subr.bf16.mxu0 0
  %961 = vmatpush1.bf16.msra.mxu0 %v926
  %962 = vmatprep.subr.bf16.mxu0 0
  %963 = vmatpush1.bf16.msra.mxu0 %v925
  %964 = vmatprep.subr.bf16.mxu0 0
  %965 = vmatpush1.bf16.msra.mxu0 %v924
  %966 = vmatprep.subr.bf16.mxu0 0
  %967 = vmatpush1.bf16.msra.mxu0 %v923
  %968 = vmatprep.subr.bf16.mxu0 0
  %969 = vmatpush1.bf16.msra.mxu0 %v922
  %970 = vmatprep.subr.bf16.mxu0 0
  %971 = vmatpush2.bf16.msra.mxu0 %v937
  %972 = vmatprep.subr.bf16.mxu0 0
  %973 = vmatpush2.bf16.msra.mxu0 %v936
  %974 = vmatprep.subr.bf16.mxu0 0
  %975 = vmatpush2.bf16.msra.mxu0 %v935
  %976 = vmatprep.subr.bf16.mxu0 0
  %977 = vmatpush2.bf16.msra.mxu0 %v934
  %978 = vmatprep.subr.bf16.mxu0 0
  %979 = vmatpush2.bf16.msra.mxu0 %v933
  %980 = vmatprep.subr.bf16.mxu0 0
  %981 = vmatpush2.bf16.msra.mxu0 %v932
  %982 = vmatprep.subr.bf16.mxu0 0
  %983 = vmatpush2.bf16.msra.mxu0 %v931
  %984 = vmatprep.subr.bf16.mxu0 0
  %985 = vmatpush2.bf16.msra.mxu0 %v930
  %986 = vmatprep.mubr.bf16.mxu0 %v818
  %987 = vmatmul.mubr.bf16.gmra.mxu0 %v817
  %v988 = vpop.f32.mrf.mxu0
  %v989 = vadd.f32 %v856, %v988
  %v990 = vpop.f32.mrf.mxu0
  %v991 = vpop.f32.mrf.mxu0
  %v992 = vpop.f32.mrf.mxu0
  %993 = vdwg.mxu0
  %v994 = vmax.f32 %v989, 0.0
  %v995 = vpack.c.bf16 %v994, %v994
  %v996 = vld [vmem:[%s5] sm:$0xf]
  %v997 = vld [vmem:[%s5 + $0x4] sm:$0xf]
  %v998 = vld [vmem:[%s5 + $0x8] sm:$0xf]
  %v999 = vld [vmem:[%s5 + $0xc] sm:$0xf]
  %v1000 = vld [vmem:[%s5 + $0x10] sm:$0xf]
  %v1001 = vld [vmem:[%s5 + $0x14] sm:$0xf]
  %v1002 = vld [vmem:[%s5 + $0x18] sm:$0xf]
  %v1003 = vld [vmem:[%s5 + $0x1c] sm:$0xf]
  %v1004 = vld [vmem:[%s5 + $0x20] sm:$0xf]
  %v1005 = vld [vmem:[%s5 + $0x24] sm:$0xf]
  %v1006 = vld [vmem:[%s5 + $0x28] sm:$0xf]
  %v1007 = vld [vmem:[%s5 + $0x2c] sm:$0xf]
  %v1008 = vld [vmem:[%s5 + $0x30] sm:$0xf]
  %v1009 = vld [vmem:[%s5 + $0x34] sm:$0xf]
  %v1010 = vld [vmem:[%s5 + $0x38] sm:$0xf]
  %v1011 = vld [vmem:[%s5 + $0x3c] sm:$0xf]
  %v1012 = vld [vmem:[%s6] sm:$0x1]
  %v1014 = vlaneseq
  %v1015 = vshrl.u32 %v1014, 7
  %v1016 = vsub.s32 0, %v1015
  %v1017 = vrot.slane %v1012, %v1016
  %v1035 = vunpack.c.l.b16 %v996
  %v1036 = vunpack.c.l.b16 %v997
  %v1037 = vunpack.c.l.b16 %v998
  %v1038 = vunpack.c.l.b16 %v999
  %v1039 = vunpack.c.l.b16 %v1000
  %v1040 = vunpack.c.l.b16 %v1001
  %v1041 = vunpack.c.l.b16 %v1002
  %v1042 = vunpack.c.l.b16 %v1003
  %v1043 = vunpack.c.l.b16 %v1004
  %v1044 = vunpack.c.l.b16 %v1005
  %v1045 = vunpack.c.l.b16 %v1006
  %v1046 = vunpack.c.l.b16 %v1007
  %v1047 = vunpack.c.l.b16 %v1008
  %v1048 = vunpack.c.l.b16 %v1009
  %v1049 = vunpack.c.l.b16 %v1010
  %v1050 = vunpack.c.l.b16 %v1011
  %v1051 = vpack.c.b16 %v1036, %v1035
  %v1052 = vpack.c.b16 %v1038, %v1037
  %v1053 = vpack.c.b16 %v1040, %v1039
  %v1054 = vpack.c.b16 %v1042, %v1041
  %v1055 = vpack.c.b16 %v1044, %v1043
  %v1056 = vpack.c.b16 %v1046, %v1045
  %v1057 = vpack.c.b16 %v1048, %v1047
  %v1058 = vpack.c.b16 %v1050, %v1049
  %1067 = vmatprep.subr.bf16.mxu0 0
  %1068 = vmatpush1.bf16.msra.mxu0 %v1058
  %1069 = vmatprep.subr.bf16.mxu0 0
  %1070 = vmatpush1.bf16.msra.mxu0 %v1057
  %1071 = vmatprep.subr.bf16.mxu0 0
  %1072 = vmatpush1.bf16.msra.mxu0 %v1056
  %1073 = vmatprep.subr.bf16.mxu0 0
  %1074 = vmatpush1.bf16.msra.mxu0 %v1055
  %1075 = vmatprep.subr.bf16.mxu0 0
  %1076 = vmatpush1.bf16.msra.mxu0 %v1054
  %1077 = vmatprep.subr.bf16.mxu0 0
  %1078 = vmatpush1.bf16.msra.mxu0 %v1053
  %1079 = vmatprep.subr.bf16.mxu0 0
  %1080 = vmatpush1.bf16.msra.mxu0 %v1052
  %1081 = vmatprep.subr.bf16.mxu0 0
  %1082 = vmatpush1.bf16.msra.mxu0 %v1051
  %1083 = vmatprep.subr.bf16.mxu0 0
  %1084 = vmatpush2.bf16.msra.mxu0 0
  %1085 = vmatprep.subr.bf16.mxu0 0
  %1086 = vmatpush2.bf16.msra.mxu0 0
  %1087 = vmatprep.subr.bf16.mxu0 0
  %1088 = vmatpush2.bf16.msra.mxu0 0
  %1089 = vmatprep.subr.bf16.mxu0 0
  %1090 = vmatpush2.bf16.msra.mxu0 0
  %1091 = vmatprep.subr.bf16.mxu0 0
  %1092 = vmatpush2.bf16.msra.mxu0 0
  %1093 = vmatprep.subr.bf16.mxu0 0
  %1094 = vmatpush2.bf16.msra.mxu0 0
  %1095 = vmatprep.subr.bf16.mxu0 0
  %1096 = vmatpush2.bf16.msra.mxu0 0
  %1097 = vmatprep.subr.bf16.mxu0 0
  %1098 = vmatpush2.bf16.msra.mxu0 0
  %1099 = vmatprep.mubr.bf16.mxu0 0
  %1100 = vmatmul.mubr.bf16.gmra.mxu0 %v995
  %v1101 = vpop.f32.mrf.mxu0
  %v1102 = vadd.f32 %v1017, %v1101
  %v1103 = vpop.f32.mrf.mxu0
  %v1104 = vpop.f32.mrf.mxu0
  %v1105 = vpop.f32.mrf.mxu0
  %1106 = vdwg.mxu0
  %v1107 = vmax.f32 %v1102, 0.0
  %v1108 = vpack.c.bf16 %v1107, %v1107
  %v1109 = vld [vmem:[%s7] sm:$0xf]
  %v1110 = vld [vmem:[%s7 + $0x4] sm:$0xf]
  %v1111 = vld [vmem:[%s7 + $0x8] sm:$0xf]
  %v1112 = vld [vmem:[%s7 + $0xc] sm:$0xf]
  %v1113 = vld [vmem:[%s7 + $0x10] sm:$0xf]
  %v1114 = vld [vmem:[%s7 + $0x14] sm:$0xf]
  %v1115 = vld [vmem:[%s7 + $0x18] sm:$0xf]
  %v1116 = vld [vmem:[%s7 + $0x1c] sm:$0xf]
  %v1117 = vld [vmem:[%s8] sm:$0x1]
  %v1119 = vlaneseq
  %v1120 = vshrl.u32 %v1119, 7
  %v1121 = vsub.s32 0, %v1120
  %v1122 = vrot.slane %v1117, %v1121
  %v1132 = vunpack.c.l.b16 %v1109
  %v1133 = vunpack.c.l.b16 %v1110
  %v1134 = vunpack.c.l.b16 %v1111
  %v1135 = vunpack.c.l.b16 %v1112
  %v1136 = vunpack.c.l.b16 %v1113
  %v1137 = vunpack.c.l.b16 %v1114
  %v1138 = vunpack.c.l.b16 %v1115
  %v1139 = vunpack.c.l.b16 %v1116
  %v1140 = vpack.c.b16 %v1133, %v1132
  %v1141 = vpack.c.b16 %v1135, %v1134
  %v1142 = vpack.c.b16 %v1137, %v1136
  %v1143 = vpack.c.b16 %v1139, %v1138
  %vm1148 = vcmask 523264
  %v1150 = vsel %vm1148, %v1108, 0
  %1152 = vmatprep.subr.bf16.mxu0 0
  %1153 = vmatpush1.bf16.msra.mxu0 0
  %1154 = vmatprep.subr.bf16.mxu0 0
  %1155 = vmatpush1.bf16.msra.mxu0 0
  %1156 = vmatprep.subr.bf16.mxu0 0
  %1157 = vmatpush1.bf16.msra.mxu0 0
  %1158 = vmatprep.subr.bf16.mxu0 0
  %1159 = vmatpush1.bf16.msra.mxu0 0
  %1160 = vmatprep.subr.bf16.mxu0 0
  %1161 = vmatpush1.bf16.msra.mxu0 %v1143
  %1162 = vmatprep.subr.bf16.mxu0 0
  %1163 = vmatpush1.bf16.msra.mxu0 %v1142
  %1164 = vmatprep.subr.bf16.mxu0 0
  %1165 = vmatpush1.bf16.msra.mxu0 %v1141
  %1166 = vmatprep.subr.bf16.mxu0 0
  %1167 = vmatpush1.bf16.msra.mxu0 %v1140
  %1168 = vmatprep.subr.bf16.mxu0 0
  %1169 = vmatpush2.bf16.msra.mxu0 0
  %1170 = vmatprep.subr.bf16.mxu0 0
  %1171 = vmatpush2.bf16.msra.mxu0 0
  %1172 = vmatprep.subr.bf16.mxu0 0
  %1173 = vmatpush2.bf16.msra.mxu0 0
  %1174 = vmatprep.subr.bf16.mxu0 0
  %1175 = vmatpush2.bf16.msra.mxu0 0
  %1176 = vmatprep.subr.bf16.mxu0 0
  %1177 = vmatpush2.bf16.msra.mxu0 0
  %1178 = vmatprep.subr.bf16.mxu0 0
  %1179 = vmatpush2.bf16.msra.mxu0 0
  %1180 = vmatprep.subr.bf16.mxu0 0
  %1181 = vmatpush2.bf16.msra.mxu0 0
  %1182 = vmatprep.subr.bf16.mxu0 0
  %1183 = vmatpush2.bf16.msra.mxu0 0
  %1184 = vmatprep.mubr.bf16.mxu0 0
  %1185 = vmatmul.mubr.bf16.gmra.mxu0 %v1150
  %v1186 = vpop.f32.mrf.mxu0
  %v1187 = vadd.f32 %v1122, %v1186
  %v1188 = vpop.f32.mrf.mxu0
  %v1189 = vpop.f32.mrf.mxu0
  %v1190 = vpop.f32.mrf.mxu0
  %1191 = vdwg.mxu0
  %vm1192 = vcmask 80896
  %1193 = vst.msk [vmem:[%s9] sm:$0xff] %vm1192, %v1187
  // Predicated region
  $region38: #{linear_model_forward.1} parent=0 // pred_check
    _
  $region39: #{linear_model_forward.1} parent=0 // pred_check_branch
    %1195 = sbr.rel (0) target = $region41
  $region40: #{linear_model_forward.1} parent=0 // pred_region
    _
  $region41: #{linear_model_forward.1} parent=0 // pred_fallthru
    _
  // Predicated region
  $region42: #{linear_model_forward.1} parent=0 // pred_check
    _
  $region43: #{linear_model_forward.1} parent=0 // pred_check_branch
    %1197 = sbr.rel (0) target = $region45
  $region44: #{linear_model_forward.1} parent=0 // pred_region
    _
  $region45: #{linear_model_forward.1} parent=0 // pred_fallthru
    _

</llo_original>
